<compile_context>
chip_gen: v7x
topology: tpu7x:2x2x1
jax: 0.10.0
libtpu: 0.0.40
codegen_flags: <defaults>
</compile_context>

<pallas_src>
import jax
import jax.numpy as jnp
from jax.experimental import pallas as pl
from jax.experimental.pallas import tpu as pltpu

OUT_FEATURES = 100   # true model output width
OUT_PADDED = 128     # lane-dense padded width used for w3/b3 and the accumulator


def knee_flexion_kernel(x_ref, w1_ref, b1_ref, w2_ref, b2_ref, w3_ref, b3_ref, o_ref):
    # ReLU on the input (first op of the nn.Sequential).
    x = jnp.maximum(x_ref[...], 0.0)                              # (TB, 4) f32

    # Linear(4 -> 32) + ReLU as 4 VPU broadcast FMAs (K=4 is too shallow for the MXU).
    h1 = (x[:, 0:1] * w1_ref[0:1, :]
          + x[:, 1:2] * w1_ref[1:2, :]
          + x[:, 2:3] * w1_ref[2:3, :]
          + x[:, 3:4] * w1_ref[3:4, :]
          + b1_ref[...])                                          # (TB, 32) f32
    h1 = jnp.maximum(h1, 0.0)

    # Linear(32 -> 64) + ReLU on the MXU in bf16 (bf16-native on v5e/v6e/v7x).
    h2 = jnp.dot(h1.astype(jnp.bfloat16), w2_ref[...],
                 preferred_element_type=jnp.float32) + b2_ref[...]
    h2 = jnp.maximum(h2, 0.0)                                     # (TB, 64) f32

    # Linear(64 -> 100): compute into a 128-lane f32 accumulator (w3 zero-padded to
    # 128 cols), store only the 100 real lanes.  One partially-masked vst group per
    # step is far cheaper than the wrapper-side re-slice it replaces.
    acc = jnp.dot(h2.astype(jnp.bfloat16), w3_ref[...],
                  preferred_element_type=jnp.float32) + b3_ref[...]   # (TB, 128)
    o_ref[...] = acc[:, :OUT_FEATURES]


def prepare_params(params):
    """Pad the final layer to 128 lanes and cast the MXU weights to bf16, offline."""
    w1, b1, w2, b2, w3, b3 = params
    w3p = jnp.pad(w3, ((0, 0), (0, OUT_PADDED - OUT_FEATURES))).astype(jnp.bfloat16)
    b3p = jnp.pad(b3, ((0, 0), (0, OUT_PADDED - OUT_FEATURES)))          # bias stays f32
    return (w1, b1, w2.astype(jnp.bfloat16), b2, w3p, b3p)


def _round_up(n, m):
    return ((n + m - 1) // m) * m


def knee_flexion_forward(x, padded_params, *, block_b=None):
    """x: (B, 4) float32 -> (B, 100) float32."""
    w1, b1, w2, b2, w3p, b3p = padded_params
    B, F = x.shape
    assert F == 4, F

    # Per-generation VMEM budget / default tile (v7x: 64 MiB physical -> 48 MiB limit,
    # TB=4096; v5e/v6e: 128 MiB physical -> 64 MiB limit, TB=8192).
    try:
        vmem_cap = int(getattr(pltpu.get_tpu_info(), "vmem_capacity_bytes", 128 << 20))
    except Exception:  # pragma: no cover - conservative fallback off-TPU
        vmem_cap = 128 << 20
    vmem_limit = min(64 << 20, (vmem_cap * 3) // 4)
    if block_b is None:
        block_b = 8192 if vmem_cap >= (96 << 20) else 4096

    # Batch tile: multiple of 8 sublanes; cap so the grid has >= 2 steps when B > 8
    # (keeps both v7x TensorCores busy via the "parallel" axis).  Pad the batch only
    # to a multiple of 8; a ragged final TB block is handled by Pallas.
    B8 = _round_up(B, 8)
    if B8 > 8:
        TB = min(block_b, _round_up(-(-B8 // 2), 8))
    else:
        TB = 8
    grid_b = pl.cdiv(B8, TB)
    if B8 != B:
        x = jnp.pad(x, ((0, B8 - B), (0, 0)))

    flops = 2 * B8 * (4 * 32 + 32 * 64 + 64 * OUT_PADDED)
    param_bytes = ((4 * 32 + 32 + 64 + OUT_PADDED) * 4          # f32 w1, b1, b2, b3
                   + (32 * 64 + 64 * OUT_PADDED) * 2)           # bf16 w2, w3
    bytes_accessed = B8 * (4 + OUT_FEATURES) * 4 + param_bytes  # x read + out write

    out = pl.pallas_call(
        knee_flexion_kernel,
        out_shape=jax.ShapeDtypeStruct((B8, OUT_FEATURES), jnp.float32),
        grid=(grid_b,),
        in_specs=[
            pl.BlockSpec((TB, 4), lambda i: (i, 0)),              # x: tiled over batch
            pl.BlockSpec((4, 32), lambda i: (0, 0)),              # weights/biases resident
            pl.BlockSpec((1, 32), lambda i: (0, 0)),
            pl.BlockSpec((32, 64), lambda i: (0, 0)),
            pl.BlockSpec((1, 64), lambda i: (0, 0)),
            pl.BlockSpec((64, OUT_PADDED), lambda i: (0, 0)),
            pl.BlockSpec((1, OUT_PADDED), lambda i: (0, 0)),
        ],
        # Lane dim 100 == full array dim (legal); no wrapper lane slice needed.
        out_specs=pl.BlockSpec((TB, OUT_FEATURES), lambda i: (i, 0)),
        compiler_params=pltpu.CompilerParams(
            dimension_semantics=("parallel",),                    # megacore on v7x
            vmem_limit_bytes=vmem_limit,
        ),
        cost_estimate=pl.CostEstimate(
            flops=flops, transcendentals=0, bytes_accessed=bytes_accessed),
    )(x, w1, b1, w2, b2, w3p, b3p)

    # Batch slice only when B is not a multiple of 8 (sublane padding rows).
    return out if B8 == B else out[:B]
    # TODO(synk): for tiny deployment batches (B ~ 2) this MLP is overhead-dominated;
    # prefer plain XLA fusion (reference_forward) or fuse it into the upstream kernel.
    # If profiling on v5e shows exposed output-writeback DMA, try
    # pipeline_mode=pl.Buffered(3) on out_specs.


def init_params(key):
    """Deterministic synthetic params matching nn.Linear shapes (stored transposed)."""
    keys = jax.random.split(key, 6)

    def lin(kw, kb, fan_in, fan_out):
        bound = 1.0 / jnp.sqrt(fan_in)
        w = jax.random.uniform(kw, (fan_in, fan_out), jnp.float32, -bound, bound)
        b = jax.random.uniform(kb, (1, fan_out), jnp.float32, -bound, bound)
        return w, b

    w1, b1 = lin(keys[0], keys[1], 4, 32)
    w2, b2 = lin(keys[2], keys[3], 32, 64)
    w3, b3 = lin(keys[4], keys[5], 64, OUT_FEATURES)
    return (w1, b1, w2, b2, w3, b3)


def reference_forward(x, params):
    """Pure-JAX f32 reference matching the PyTorch module."""
    w1, b1, w2, b2, w3, b3 = params
    h = jnp.maximum(x, 0.0)
    h = jnp.maximum(h @ w1 + b1, 0.0)
    h = jnp.maximum(h @ w2 + b2, 0.0)
    return h @ w3 + b3


if __name__ == "__main__":
    key = jax.random.PRNGKey(0)
    k_x, k_p = jax.random.split(key)

    # Small batch of 4-feature inputs (knee-flexion sensor features).
    x = jax.random.normal(k_x, (2, 4), dtype=jnp.float32)
    params = init_params(k_p)
    padded_params = prepare_params(params)

    out = knee_flexion_forward(x, padded_params)
    out = jax.block_until_ready(out)

    ref = reference_forward(x, params)
    assert out.shape == (2, OUT_FEATURES), out.shape
    # Tolerance loosened for the bf16 MXU matmuls (f32 reference).
    assert jnp.allclose(out, ref, atol=2e-2, rtol=2e-2), "mismatch vs reference"

    print("KERNEL_OK")
</pallas_src>

<mosaic_0001>
module attributes {stable_mosaic.version = 11 : i64} {
  func.func @knee_flexion_kernel(%arg0: i32, %arg1: memref<8x4xf32, #tpu.memory_space<vmem>>, %arg2: memref<4x32xf32, #tpu.memory_space<vmem>>, %arg3: memref<1x32xf32, #tpu.memory_space<vmem>>, %arg4: memref<32x64xbf16, #tpu.memory_space<vmem>>, %arg5: memref<1x64xf32, #tpu.memory_space<vmem>>, %arg6: memref<64x128xbf16, #tpu.memory_space<vmem>>, %arg7: memref<1x128xf32, #tpu.memory_space<vmem>>, %arg8: memref<8x100xf32, #tpu.memory_space<vmem>>) attributes {dimension_semantics = [#tpu.dimension_semantics<parallel>], iteration_bounds = array<i64: 1>, scalar_prefetch = 0 : i64, scratch_operands = 0 : i64, tpu.core_type = #tpu.core_type<tc>, window_params = [{transform_indices = @transform_0, window_bounds = array<i64: 8, 4>}, {pipeline_mode = #tpu.pipeline_mode<synchronous>, transform_indices = @transform_1, window_bounds = array<i64: 4, 32>}, {pipeline_mode = #tpu.pipeline_mode<synchronous>, transform_indices = @transform_2, window_bounds = array<i64: 1, 32>}, {pipeline_mode = #tpu.pipeline_mode<synchronous>, transform_indices = @transform_3, window_bounds = array<i64: 32, 64>}, {pipeline_mode = #tpu.pipeline_mode<synchronous>, transform_indices = @transform_4, window_bounds = array<i64: 1, 64>}, {pipeline_mode = #tpu.pipeline_mode<synchronous>, transform_indices = @transform_5, window_bounds = array<i64: 64, 128>}, {pipeline_mode = #tpu.pipeline_mode<synchronous>, transform_indices = @transform_6, window_bounds = array<i64: 1, 128>}, {transform_indices = @transform_7, window_bounds = array<i64: 8, 100>}]} {
    %c0 = arith.constant 0 : index
    %c0_0 = arith.constant 0 : index
    %0 = vector.load %arg1[%c0, %c0_0] : memref<8x4xf32, #tpu.memory_space<vmem>>, vector<8x4xf32>
    %cst = arith.constant 0.000000e+00 : f32
    %1 = vector.broadcast %cst : f32 to vector<8x4xf32>
    %2 = arith.maximumf %0, %1 : vector<8x4xf32>
    %3 = vector.extract_strided_slice %2 {offsets = [0, 0], sizes = [8, 1], strides = [1, 1]} : vector<8x4xf32> to vector<8x1xf32>
    %c0_1 = arith.constant 0 : index
    %c0_2 = arith.constant 0 : index
    %4 = vector.load %arg2[%c0_1, %c0_2] : memref<4x32xf32, #tpu.memory_space<vmem>>, vector<1x32xf32>
    %5 = vector.broadcast %3 : vector<8x1xf32> to vector<8x32xf32>
    %6 = vector.broadcast %4 : vector<1x32xf32> to vector<8x32xf32>
    %7 = arith.mulf %5, %6 : vector<8x32xf32>
    %8 = vector.extract_strided_slice %2 {offsets = [0, 1], sizes = [8, 1], strides = [1, 1]} : vector<8x4xf32> to vector<8x1xf32>
    %c1 = arith.constant 1 : index
    %c0_3 = arith.constant 0 : index
    %9 = vector.load %arg2[%c1, %c0_3] : memref<4x32xf32, #tpu.memory_space<vmem>>, vector<1x32xf32>
    %10 = vector.broadcast %8 : vector<8x1xf32> to vector<8x32xf32>
    %11 = vector.broadcast %9 : vector<1x32xf32> to vector<8x32xf32>
    %12 = arith.mulf %10, %11 : vector<8x32xf32>
    %13 = arith.addf %7, %12 : vector<8x32xf32>
    %14 = vector.extract_strided_slice %2 {offsets = [0, 2], sizes = [8, 1], strides = [1, 1]} : vector<8x4xf32> to vector<8x1xf32>
    %c2 = arith.constant 2 : index
    %c0_4 = arith.constant 0 : index
    %15 = vector.load %arg2[%c2, %c0_4] : memref<4x32xf32, #tpu.memory_space<vmem>>, vector<1x32xf32>
    %16 = vector.broadcast %14 : vector<8x1xf32> to vector<8x32xf32>
    %17 = vector.broadcast %15 : vector<1x32xf32> to vector<8x32xf32>
    %18 = arith.mulf %16, %17 : vector<8x32xf32>
    %19 = arith.addf %13, %18 : vector<8x32xf32>
    %20 = vector.extract_strided_slice %2 {offsets = [0, 3], sizes = [8, 1], strides = [1, 1]} : vector<8x4xf32> to vector<8x1xf32>
    %c3 = arith.constant 3 : index
    %c0_5 = arith.constant 0 : index
    %21 = vector.load %arg2[%c3, %c0_5] : memref<4x32xf32, #tpu.memory_space<vmem>>, vector<1x32xf32>
    %22 = vector.broadcast %20 : vector<8x1xf32> to vector<8x32xf32>
    %23 = vector.broadcast %21 : vector<1x32xf32> to vector<8x32xf32>
    %24 = arith.mulf %22, %23 : vector<8x32xf32>
    %25 = arith.addf %19, %24 : vector<8x32xf32>
    %c0_6 = arith.constant 0 : index
    %c0_7 = arith.constant 0 : index
    %26 = vector.load %arg3[%c0_6, %c0_7] : memref<1x32xf32, #tpu.memory_space<vmem>>, vector<1x32xf32>
    %27 = vector.broadcast %26 : vector<1x32xf32> to vector<8x32xf32>
    %28 = arith.addf %25, %27 : vector<8x32xf32>
    %cst_8 = arith.constant 0.000000e+00 : f32
    %29 = vector.broadcast %cst_8 : f32 to vector<8x32xf32>
    %30 = arith.maximumf %28, %29 : vector<8x32xf32>
    %31 = arith.truncf %30 : vector<8x32xf32> to vector<8x32xbf16>
    %c0_9 = arith.constant 0 : index
    %c0_10 = arith.constant 0 : index
    %32 = vector.load %arg4[%c0_9, %c0_10] : memref<32x64xbf16, #tpu.memory_space<vmem>>, vector<32x64xbf16>
    %cst_11 = arith.constant dense<0.000000e+00> : vector<8x64xf32>
    %33 = tpu.matmul %31, %32, %cst_11 {dimension_numbers = #tpu.dot_dimension_numbers<[1], [0], [0], [1], [0, 0, 1, 1], [], []>} : vector<8x32xbf16>, vector<32x64xbf16>, vector<8x64xf32> -> vector<8x64xf32>
    %c0_12 = arith.constant 0 : index
    %c0_13 = arith.constant 0 : index
    %34 = vector.load %arg5[%c0_12, %c0_13] : memref<1x64xf32, #tpu.memory_space<vmem>>, vector<1x64xf32>
    %35 = vector.broadcast %34 : vector<1x64xf32> to vector<8x64xf32>
    %36 = arith.addf %33, %35 : vector<8x64xf32>
    %cst_14 = arith.constant 0.000000e+00 : f32
    %37 = vector.broadcast %cst_14 : f32 to vector<8x64xf32>
    %38 = arith.maximumf %36, %37 : vector<8x64xf32>
    %39 = arith.truncf %38 : vector<8x64xf32> to vector<8x64xbf16>
    %c0_15 = arith.constant 0 : index
    %c0_16 = arith.constant 0 : index
    %40 = vector.load %arg6[%c0_15, %c0_16] : memref<64x128xbf16, #tpu.memory_space<vmem>>, vector<64x128xbf16>
    %cst_17 = arith.constant dense<0.000000e+00> : vector<8x128xf32>
    %41 = tpu.matmul %39, %40, %cst_17 {dimension_numbers = #tpu.dot_dimension_numbers<[1], [0], [0], [1], [0, 0, 1, 1], [], []>} : vector<8x64xbf16>, vector<64x128xbf16>, vector<8x128xf32> -> vector<8x128xf32>
    %c0_18 = arith.constant 0 : index
    %c0_19 = arith.constant 0 : index
    %42 = vector.load %arg7[%c0_18, %c0_19] : memref<1x128xf32, #tpu.memory_space<vmem>>, vector<1x128xf32>
    %43 = vector.broadcast %42 : vector<1x128xf32> to vector<8x128xf32>
    %44 = arith.addf %41, %43 : vector<8x128xf32>
    %45 = vector.extract_strided_slice %44 {offsets = [0, 0], sizes = [8, 100], strides = [1, 1]} : vector<8x128xf32> to vector<8x100xf32>
    %c0_20 = arith.constant 0 : index
    %c0_21 = arith.constant 0 : index
    %46 = vector.load %arg8[%c0_20, %c0_21] : memref<8x100xf32, #tpu.memory_space<vmem>>, vector<8x100xf32>
    tpu.vector_store %arg8[%c0_20, %c0_21], %45 {strides = array<i32>} : memref<8x100xf32, #tpu.memory_space<vmem>>, vector<8x100xf32>,
    return
  }
  func.func @transform_0(%arg0: i32) -> (i32, i32) {
    %c0_i32 = arith.constant 0 : i32
    %c0_i32_0 = arith.constant 0 : i32
    return %arg0, %c0_i32 : i32, i32
  }
  func.func @transform_1(%arg0: i32) -> (i32, i32) {
    %c0_i32 = arith.constant 0 : i32
    %c0_i32_0 = arith.constant 0 : i32
    %c0_i32_1 = arith.constant 0 : i32
    return %c0_i32, %c0_i32_0 : i32, i32
  }
  func.func @transform_2(%arg0: i32) -> (i32, i32) {
    %c0_i32 = arith.constant 0 : i32
    %c0_i32_0 = arith.constant 0 : i32
    %c0_i32_1 = arith.constant 0 : i32
    return %c0_i32, %c0_i32_0 : i32, i32
  }
  func.func @transform_3(%arg0: i32) -> (i32, i32) {
    %c0_i32 = arith.constant 0 : i32
    %c0_i32_0 = arith.constant 0 : i32
    %c0_i32_1 = arith.constant 0 : i32
    return %c0_i32, %c0_i32_0 : i32, i32
  }
  func.func @transform_4(%arg0: i32) -> (i32, i32) {
    %c0_i32 = arith.constant 0 : i32
    %c0_i32_0 = arith.constant 0 : i32
    %c0_i32_1 = arith.constant 0 : i32
    return %c0_i32, %c0_i32_0 : i32, i32
  }
  func.func @transform_5(%arg0: i32) -> (i32, i32) {
    %c0_i32 = arith.constant 0 : i32
    %c0_i32_0 = arith.constant 0 : i32
    %c0_i32_1 = arith.constant 0 : i32
    return %c0_i32, %c0_i32_0 : i32, i32
  }
  func.func @transform_6(%arg0: i32) -> (i32, i32) {
    %c0_i32 = arith.constant 0 : i32
    %c0_i32_0 = arith.constant 0 : i32
    %c0_i32_1 = arith.constant 0 : i32
    return %c0_i32, %c0_i32_0 : i32, i32
  }
  func.func @transform_7(%arg0: i32) -> (i32, i32) {
    %c0_i32 = arith.constant 0 : i32
    %c0_i32_0 = arith.constant 0 : i32
    return %arg0, %c0_i32 : i32, i32
  }
}

</mosaic_0001>

<llo_original>
// kernel: tpu_custom_call.1
$region0: #{tpu_custom_call.1}
  #allocation0 [shape = 'u32[]', space=smem, size = 0x4, offset = 0x4, fixed_abs, tag = 'smem constant byte address 0x4 - core index']
  #allocation1 [shape = 'u32[144,128]{1,0:T(1,128)}', space=vmem, size = 0x12000, scoped, tag = 'internal scratch']
  %s0 = inlined_call_operand.hbm [shape: f32[8,4], index: 0, kind: input, shape index: {}]
  %s1 = inlined_call_operand.hbm [shape: f32[4,32], index: 1, kind: input, shape index: {}]
  %s2 = inlined_call_operand.hbm [shape: f32[1,32], index: 2, kind: input, shape index: {}]
  %s3 = inlined_call_operand.hbm [shape: bf16[32,64], index: 3, kind: input, shape index: {}]
  %s4 = inlined_call_operand.hbm [shape: f32[1,64], index: 4, kind: input, shape index: {}]
  %s5 = inlined_call_operand.hbm [shape: bf16[64,128], index: 5, kind: input, shape index: {}]
  %s6 = inlined_call_operand.hbm [shape: f32[1,128], index: 6, kind: input, shape index: {}]
  %s7 = inlined_call_operand.hbm [shape: f32[8,100], index: 7, kind: output, shape index: {}]
  %s8 = sld [smem:[#allocation0]]
  $region66: #{tpu_custom_call.1} parent=0
    _
  %s10 = ssub.s32 1, %s8
  %s11 = scalar_select 0, %s10, %s8
  $region1: #{tpu_custom_call.1} parent=0
    #allocation2 [shape = 'u8[4096]{0}', space=vmem, size = 0x1000, scoped, tag = 'input window, operand 0, single buffered']
    #allocation3 [shape = 's32[1]{0}', space=sflag, size = 0x4, scoped, tag = 'scoped memory for tpu_custom_call.1']
    #allocation4 [shape = 's32[1]{0}', space=sflag, size = 0x4, scoped, tag = 'scoped memory for tpu_custom_call.1']
    #allocation5 [shape = 'u8[2048]{0}', space=vmem, size = 0x800, scoped, tag = 'input window, operand 1, single buffered']
    #allocation6 [shape = 's32[1]{0}', space=sflag, size = 0x4, scoped, tag = 'scoped memory for tpu_custom_call.1']
    #allocation7 [shape = 'u8[512]{0}', space=vmem, size = 0x400, scoped, tag = 'input window, operand 2, single buffered']
    #allocation8 [shape = 'u8[8192]{0}', space=vmem, size = 0x2000, scoped, tag = 'input window, operand 3, single buffered']
    #allocation9 [shape = 's32[1]{0}', space=sflag, size = 0x4, scoped, tag = 'scoped memory for tpu_custom_call.1']
    #allocation10 [shape = 'u8[512]{0}', space=vmem, size = 0x400, scoped, tag = 'input window, operand 4, single buffered']
    #allocation11 [shape = 'u8[16384]{0}', space=vmem, size = 0x4000, scoped, tag = 'input window, operand 5, single buffered']
    #allocation12 [shape = 's32[1]{0}', space=sflag, size = 0x4, scoped, tag = 'scoped memory for tpu_custom_call.1']
    #allocation13 [shape = 'u8[512]{0}', space=vmem, size = 0x400, scoped, tag = 'input window, operand 6, single buffered']
    #allocation14 [shape = 'u8[4096]{0}', space=vmem, size = 0x1000, scoped, tag = 'output window, operand 0, single buffered']
    %12 = vsyncpa [#allocation3], 0
    %13 = vsyncpa [#allocation6], 0
    %14 = vsyncpa [#allocation9], 0
    %15 = vsyncpa [#allocation12], 0
    %16 = vsyncpa [#allocation4], 0
    // Predicated region
    $region2: #{tpu_custom_call.1} parent=1 // pred_check
      _
    $region3: #{tpu_custom_call.1} parent=1 // pred_check_branch
      %18 = sbr.rel (0) target = $region5
    $region4: #{tpu_custom_call.1} parent=1 // pred_region
      %s20 = ssub.s32 128, 128
      %21 = vsyncadd [#allocation3], %s20
      %s23 = sshll.u32 [#allocation2], 4
      %s24 = int_to_ptr.vmem [resolvable:$true] %s23
      %26 = dma.hbm_to_vmem [thread:$0]  %s0, 128, %s24, [#allocation3]
    $region5: #{tpu_custom_call.1} parent=1 // pred_fallthru
      _
    // Predicated region
    $region6: #{tpu_custom_call.1} parent=1 // pred_check
      _
    $region7: #{tpu_custom_call.1} parent=1 // pred_check_branch
      %28 = sbr.rel (0) target = $region9
    $region8: #{tpu_custom_call.1} parent=1 // pred_region
      %s30 = ssub.s32 64, 64
      %31 = vsyncadd [#allocation6], %s30
      %s33 = sshll.u32 [#allocation5], 4
      %s34 = int_to_ptr.vmem [resolvable:$true] %s33
      %36 = dma.hbm_to_vmem [thread:$0]  %s1, 64, %s34, [#allocation6]
    $region9: #{tpu_custom_call.1} parent=1 // pred_fallthru
      _
    // Predicated region
    $region10: #{tpu_custom_call.1} parent=1 // pred_check
      _
    $region11: #{tpu_custom_call.1} parent=1 // pred_check_branch
      %38 = sbr.rel (0) target = $region13
    $region12: #{tpu_custom_call.1} parent=1 // pred_region
      %s40 = ssub.s32 16, 16
      %41 = vsyncadd [#allocation6], %s40
      %s43 = sshll.u32 [#allocation7], 4
      %s44 = int_to_ptr.vmem [resolvable:$true] %s43
      %46 = dma.hbm_to_vmem [thread:$0]  %s2, 16, %s44, [#allocation6]
    $region13: #{tpu_custom_call.1} parent=1 // pred_fallthru
      _
    // Predicated region
    $region14: #{tpu_custom_call.1} parent=1 // pred_check
      _
    $region15: #{tpu_custom_call.1} parent=1 // pred_check_branch
      %48 = sbr.rel (0) target = $region17
    $region16: #{tpu_custom_call.1} parent=1 // pred_region
      %s50 = ssub.s32 256, 256
      %51 = vsyncadd [#allocation9], %s50
      %s52 = sshll.u32 [#allocation8], 4
      %s53 = int_to_ptr.vmem [resolvable:$true] %s52
      %58 = dma.hbm_to_vmem [thread:$0]  %s3, 256, %s53, [#allocation9], 64, 64, 4
    $region17: #{tpu_custom_call.1} parent=1 // pred_fallthru
      _
    // Predicated region
    $region18: #{tpu_custom_call.1} parent=1 // pred_check
      _
    $region19: #{tpu_custom_call.1} parent=1 // pred_check_branch
      %60 = sbr.rel (0) target = $region21
    $region20: #{tpu_custom_call.1} parent=1 // pred_region
      %s62 = ssub.s32 16, 16
      %63 = vsyncadd [#allocation9], %s62
      %s65 = sshll.u32 [#allocation10], 4
      %s66 = int_to_ptr.vmem [resolvable:$true] %s65
      %68 = dma.hbm_to_vmem [thread:$0]  %s4, 16, %s66, [#allocation9]
    $region21: #{tpu_custom_call.1} parent=1 // pred_fallthru
      _
    // Predicated region
    $region22: #{tpu_custom_call.1} parent=1 // pred_check
      _
    $region23: #{tpu_custom_call.1} parent=1 // pred_check_branch
      %70 = sbr.rel (0) target = $region25
    $region24: #{tpu_custom_call.1} parent=1 // pred_region
      %s72 = ssub.s32 512, 512
      %73 = vsyncadd [#allocation12], %s72
      %s74 = sshll.u32 [#allocation11], 4
      %s75 = int_to_ptr.vmem [resolvable:$true] %s74
      %80 = dma.hbm_to_vmem [thread:$0]  %s5, 512, %s75, [#allocation12], 64, 64, 4
    $region25: #{tpu_custom_call.1} parent=1 // pred_fallthru
      _
    // Predicated region
    $region26: #{tpu_custom_call.1} parent=1 // pred_check
      _
    $region27: #{tpu_custom_call.1} parent=1 // pred_check_branch
      %82 = sbr.rel (0) target = $region29
    $region28: #{tpu_custom_call.1} parent=1 // pred_region
      %s84 = ssub.s32 16, 16
      %85 = vsyncadd [#allocation12], %s84
      %s87 = sshll.u32 [#allocation13], 4
      %s88 = int_to_ptr.vmem [resolvable:$true] %s87
      %90 = dma.hbm_to_vmem [thread:$0]  %s6, 16, %s88, [#allocation12]
    $region29: #{tpu_custom_call.1} parent=1 // pred_fallthru
      _
    // Predicated region
    $region30: #{tpu_custom_call.1} parent=1 // pred_check
      _
    $region31: #{tpu_custom_call.1} parent=1 // pred_check_branch
      %92 = sbr.rel (0) target = $region33
    $region32: #{tpu_custom_call.1} parent=1 // pred_region
      %93 = dma.done [#allocation3], 128
    $region33: #{tpu_custom_call.1} parent=1 // pred_fallthru
      _
    // Predicated region
    $region34: #{tpu_custom_call.1} parent=1 // pred_check
      _
    $region35: #{tpu_custom_call.1} parent=1 // pred_check_branch
      %95 = sbr.rel (0) target = $region37
    $region36: #{tpu_custom_call.1} parent=1 // pred_region
      %96 = dma.done [#allocation6], 64
    $region37: #{tpu_custom_call.1} parent=1 // pred_fallthru
      _
    // Predicated region
    $region38: #{tpu_custom_call.1} parent=1 // pred_check
      _
    $region39: #{tpu_custom_call.1} parent=1 // pred_check_branch
      %98 = sbr.rel (0) target = $region41
    $region40: #{tpu_custom_call.1} parent=1 // pred_region
      %99 = dma.done [#allocation6], 16
    $region41: #{tpu_custom_call.1} parent=1 // pred_fallthru
      _
    // Predicated region
    $region42: #{tpu_custom_call.1} parent=1 // pred_check
      _
    $region43: #{tpu_custom_call.1} parent=1 // pred_check_branch
      %101 = sbr.rel (0) target = $region45
    $region44: #{tpu_custom_call.1} parent=1 // pred_region
      %102 = dma.done [#allocation9], 256
    $region45: #{tpu_custom_call.1} parent=1 // pred_fallthru
      _
    // Predicated region
    $region46: #{tpu_custom_call.1} parent=1 // pred_check
      _
    $region47: #{tpu_custom_call.1} parent=1 // pred_check_branch
      %104 = sbr.rel (0) target = $region49
    $region48: #{tpu_custom_call.1} parent=1 // pred_region
      %105 = dma.done [#allocation9], 16
    $region49: #{tpu_custom_call.1} parent=1 // pred_fallthru
      _
    // Predicated region
    $region50: #{tpu_custom_call.1} parent=1 // pred_check
      _
    $region51: #{tpu_custom_call.1} parent=1 // pred_check_branch
      %107 = sbr.rel (0) target = $region53
    $region52: #{tpu_custom_call.1} parent=1 // pred_region
      %108 = dma.done [#allocation12], 512
    $region53: #{tpu_custom_call.1} parent=1 // pred_fallthru
      _
    // Predicated region
    $region54: #{tpu_custom_call.1} parent=1 // pred_check
      _
    $region55: #{tpu_custom_call.1} parent=1 // pred_check_branch
      %110 = sbr.rel (0) target = $region57
    $region56: #{tpu_custom_call.1} parent=1 // pred_region
      %111 = dma.done [#allocation12], 16
    $region57: #{tpu_custom_call.1} parent=1 // pred_fallthru
      _
    %v113 = vld [vmem:[#allocation2] sm:$0xff]
    %v114 = vmax.f32 %v113, 0.0
    %v115 = vld [vmem:[#allocation5] sm:$0x1]
    %117 = vset.pattern.permute.xlu0 0
    %118 = vperm.xlu0 %117, %v114
    %v119 = vpop.permute.xlu0 %118
    %v121 = vlaneseq
    %v122 = vshrl.u32 %v121, 7
    %v123 = vsub.s32 0, %v122
    %v124 = vrot.slane %v115, %v123
    %v125 = vmul.f32 %v119, %v124
    %v126 = vld [vmem:[#allocation5 + $0x1] sm:$0x1]
    %127 = vset.pattern.permute.xlu0 1
    %128 = vperm.xlu0 %127, %v114
    %v129 = vpop.permute.xlu0 %128
    %v131 = vlaneseq
    %v132 = vshrl.u32 %v131, 7
    %v133 = vsub.s32 0, %v132
    %v134 = vrot.slane %v126, %v133
    %v135 = vmul.f32 %v129, %v134
    %v136 = vadd.f32 %v125, %v135
    %v137 = vld [vmem:[#allocation5 + $0x2] sm:$0x1]
    %138 = vset.pattern.permute.xlu0 2
    %139 = vperm.xlu0 %138, %v114
    %v140 = vpop.permute.xlu0 %139
    %v142 = vlaneseq
    %v143 = vshrl.u32 %v142, 7
    %v144 = vsub.s32 0, %v143
    %v145 = vrot.slane %v137, %v144
    %v146 = vmul.f32 %v140, %v145
    %v147 = vadd.f32 %v136, %v146
    %v148 = vld [vmem:[#allocation5 + $0x3] sm:$0x1]
    %149 = vset.pattern.permute.xlu0 3
    %150 = vperm.xlu0 %149, %v114
    %v151 = vpop.permute.xlu0 %150
    %v153 = vlaneseq
    %v154 = vshrl.u32 %v153, 7
    %v155 = vsub.s32 0, %v154
    %v156 = vrot.slane %v148, %v155
    %v157 = vmul.f32 %v151, %v156
    %v158 = vadd.f32 %v147, %v157
    %v159 = vld [vmem:[#allocation7] sm:$0x1]
    %v161 = vlaneseq
    %v162 = vshrl.u32 %v161, 7
    %v163 = vsub.s32 0, %v162
    %v164 = vrot.slane %v159, %v163
    %v166 = vadd.f32 %v158, %v164
    %v167 = vmax.f32 %v166, 0.0
    %v168 = vpack.c.bf16 %v167, %v167
    %v169 = vld [vmem:[#allocation8] sm:$0xf]
    %v170 = vld [vmem:[#allocation8 + $0x4] sm:$0xf]
    %v171 = vld [vmem:[#allocation8 + $0x8] sm:$0xf]
    %v172 = vld [vmem:[#allocation8 + $0xc] sm:$0xf]
    %v173 = vld [vmem:[#allocation10] sm:$0x1]
    %v175 = vlaneseq
    %v176 = vshrl.u32 %v175, 7
    %v177 = vsub.s32 0, %v176
    %v178 = vrot.slane %v173, %v177
    %v184 = vunpack.c.l.b16 %v169
    %v185 = vunpack.c.l.b16 %v170
    %v186 = vunpack.c.l.b16 %v171
    %v187 = vunpack.c.l.b16 %v172
    %v188 = vpack.c.b16 %v185, %v184
    %v189 = vpack.c.b16 %v187, %v186
    %vm192 = vcmask 261120
    %v194 = vsel %vm192, %v168, 0
    %196 = vmatprep.subr.bf16.mxu0 0
    %197 = vmatpush1.bf16.msra.mxu0 %v188
    %198 = vmatprep.subr.bf16.mxu0 0
    %199 = vmatpush1.bf16.msra.mxu0 %v189
    %200 = vmatprep.subr.bf16.mxu0 0
    %201 = vmatpush1.bf16.msra.mxu0 0
    %202 = vmatprep.subr.bf16.mxu0 0
    %203 = vmatpush1.bf16.msra.mxu0 0
    %204 = vmatprep.subr.bf16.mxu0 0
    %205 = vmatpush1.bf16.msra.mxu0 0
    %206 = vmatprep.subr.bf16.mxu0 0
    %207 = vmatpush1.bf16.msra.mxu0 0
    %208 = vmatprep.subr.bf16.mxu0 0
    %209 = vmatpush1.bf16.msra.mxu0 0
    %210 = vmatprep.subr.bf16.mxu0 0
    %211 = vmatpush1.bf16.msra.mxu0 0
    %212 = vmatprep.subr.bf16.mxu0 0
    %213 = vmatpush1.bf16.msra.mxu0 0
    %214 = vmatprep.subr.bf16.mxu0 0
    %215 = vmatpush1.bf16.msra.mxu0 0
    %216 = vmatprep.subr.bf16.mxu0 0
    %217 = vmatpush1.bf16.msra.mxu0 0
    %218 = vmatprep.subr.bf16.mxu0 0
    %219 = vmatpush1.bf16.msra.mxu0 0
    %220 = vmatprep.subr.bf16.mxu0 0
    %221 = vmatpush1.bf16.msra.mxu0 0
    %222 = vmatprep.subr.bf16.mxu0 0
    %223 = vmatpush1.bf16.msra.mxu0 0
    %224 = vmatprep.subr.bf16.mxu0 0
    %225 = vmatpush1.bf16.msra.mxu0 0
    %226 = vmatprep.subr.bf16.mxu0 0
    %227 = vmatpush1.bf16.msra.mxu0 0
    %228 = vmatprep.mubr.bf16.mxu0 0
    %229 = vmatmul.mubr.bf16.gmra.mrb[0].mxu0 %v194
    %v230 = vpop.f32.mrb[0].mxu0
    %v231 = vadd.f32 %v178, %v230
    %v232 = vpop.f32.mrb[0].mxu0
    %v233 = vpop.f32.mrb[0].mxu0
    %v234 = vpop.f32.mrb[0].mxu0
    %235 = vdwg.mxu0
    %v236 = vmax.f32 %v231, 0.0
    %v237 = vpack.c.bf16 %v236, %v236
    %v238 = vld [vmem:[#allocation11] sm:$0xf]
    %v239 = vld [vmem:[#allocation11 + $0x4] sm:$0xf]
    %v240 = vld [vmem:[#allocation11 + $0x8] sm:$0xf]
    %v241 = vld [vmem:[#allocation11 + $0xc] sm:$0xf]
    %v242 = vld [vmem:[#allocation11 + $0x10] sm:$0xf]
    %v243 = vld [vmem:[#allocation11 + $0x14] sm:$0xf]
    %v244 = vld [vmem:[#allocation11 + $0x18] sm:$0xf]
    %v245 = vld [vmem:[#allocation11 + $0x1c] sm:$0xf]
    %v246 = vld [vmem:[#allocation13] sm:$0x1]
    %v248 = vlaneseq
    %v249 = vshrl.u32 %v248, 7
    %v250 = vsub.s32 0, %v249
    %v251 = vrot.slane %v246, %v250
    %v261 = vunpack.c.l.b16 %v238
    %v262 = vunpack.c.l.b16 %v239
    %v263 = vunpack.c.l.b16 %v240
    %v264 = vunpack.c.l.b16 %v241
    %v265 = vunpack.c.l.b16 %v242
    %v266 = vunpack.c.l.b16 %v243
    %v267 = vunpack.c.l.b16 %v244
    %v268 = vunpack.c.l.b16 %v245
    %v269 = vpack.c.b16 %v262, %v261
    %v270 = vpack.c.b16 %v264, %v263
    %v271 = vpack.c.b16 %v266, %v265
    %v272 = vpack.c.b16 %v268, %v267
    %vm277 = vcmask 523264
    %v279 = vsel %vm277, %v237, 0
    %281 = vmatprep.subr.bf16.mxu0 0
    %282 = vmatpush1.bf16.msra.mxu0 %v269
    %283 = vmatprep.subr.bf16.mxu0 0
    %284 = vmatpush1.bf16.msra.mxu0 %v270
    %285 = vmatprep.subr.bf16.mxu0 0
    %286 = vmatpush1.bf16.msra.mxu0 %v271
    %287 = vmatprep.subr.bf16.mxu0 0
    %288 = vmatpush1.bf16.msra.mxu0 %v272
    %289 = vmatprep.subr.bf16.mxu0 0
    %290 = vmatpush1.bf16.msra.mxu0 0
    %291 = vmatprep.subr.bf16.mxu0 0
    %292 = vmatpush1.bf16.msra.mxu0 0
    %293 = vmatprep.subr.bf16.mxu0 0
    %294 = vmatpush1.bf16.msra.mxu0 0
    %295 = vmatprep.subr.bf16.mxu0 0
    %296 = vmatpush1.bf16.msra.mxu0 0
    %297 = vmatprep.subr.bf16.mxu0 0
    %298 = vmatpush1.bf16.msra.mxu0 0
    %299 = vmatprep.subr.bf16.mxu0 0
    %300 = vmatpush1.bf16.msra.mxu0 0
    %301 = vmatprep.subr.bf16.mxu0 0
    %302 = vmatpush1.bf16.msra.mxu0 0
    %303 = vmatprep.subr.bf16.mxu0 0
    %304 = vmatpush1.bf16.msra.mxu0 0
    %305 = vmatprep.subr.bf16.mxu0 0
    %306 = vmatpush1.bf16.msra.mxu0 0
    %307 = vmatprep.subr.bf16.mxu0 0
    %308 = vmatpush1.bf16.msra.mxu0 0
    %309 = vmatprep.subr.bf16.mxu0 0
    %310 = vmatpush1.bf16.msra.mxu0 0
    %311 = vmatprep.subr.bf16.mxu0 0
    %312 = vmatpush1.bf16.msra.mxu0 0
    %313 = vmatprep.mubr.bf16.mxu0 0
    %314 = vmatmul.mubr.bf16.gmra.mrb[0].mxu0 %v279
    %v315 = vpop.f32.mrb[0].mxu0
    %v316 = vadd.f32 %v251, %v315
    %v317 = vpop.f32.mrb[0].mxu0
    %v318 = vpop.f32.mrb[0].mxu0
    %v319 = vpop.f32.mrb[0].mxu0
    %320 = vdwg.mxu0
    %vm321 = vcmask 818176
    %322 = vst.msk [vmem:[#allocation14] sm:$0xff] %vm321, %v316
    // Predicated region
    $region58: #{tpu_custom_call.1} parent=1 // pred_check
      _
    $region59: #{tpu_custom_call.1} parent=1 // pred_check_branch
      %324 = sbr.rel (0) target = $region61
    $region60: #{tpu_custom_call.1} parent=1 // pred_region
      %s326 = ssub.s32 128, 128
      %327 = vsyncadd [#allocation4], %s326
      %s329 = sshll.u32 [#allocation14], 4
      %s330 = int_to_ptr.vmem [resolvable:$true] %s329
      %332 = dma.vmem_to_hbm [thread:$0]  %s330, 128, %s7, [#allocation4]
    $region61: #{tpu_custom_call.1} parent=1 // pred_fallthru
      _
    // Predicated region
    $region62: #{tpu_custom_call.1} parent=1 // pred_check
      _
    $region63: #{tpu_custom_call.1} parent=1 // pred_check_branch
      %334 = sbr.rel (0) target = $region65
    $region64: #{tpu_custom_call.1} parent=1 // pred_region
      %335 = dma.done [#allocation4], 128
    $region65: #{tpu_custom_call.1} parent=1 // pred_fallthru
      _
    %336 = vsyncpa [#allocation3], 1
    %337 = vsyncpa [#allocation6], 1
    %338 = vsyncpa [#allocation9], 1
    %339 = vsyncpa [#allocation12], 1
    %340 = vsyncpa [#allocation4], 1

</llo_original>
